<compile_context>
chip_gen: v5e
topology: v5e:2x2
jax: 0.10.0
libtpu: 0.0.40
codegen_flags: <defaults>
</compile_context>

<pallas_src>
import functools
import math

import jax
import jax.numpy as jnp
from jax import lax
from jax.experimental import pallas as pl
from jax.experimental.pallas import tpu as pltpu


def _round_up(x, m):
    return ((x + m - 1) // m) * m


# ----------------------------------------------------------------------------
# Pallas kernel: one (tile, tile) block of
#   K = variance * exp(-0.5 * ||xi - xj||^2 / ls^2) + eye * noise_var
# The full exp argument arrives straight out of the MXU:
#   arg = A_i . B_j = gamma * ||xi - xj||^2 + log(variance),  gamma = -0.5/ls^2
# clamped so squared distance >= 0 (arg <= log_var), then exp on the EUP.
# Only lower-triangular tiles (i >= j) are computed; upper tiles store zeros.
# ----------------------------------------------------------------------------
def _rbf_gram_kernel(a_ref, b_ref, o_ref, *, log_var, noise_var):
    i = pl.program_id(0)
    j = pl.program_id(1)

    # Strictly-lower tiles: MXU contraction + clamp + EUP exp + plain store.
    @pl.when(i > j)
    def _():
        arg = jnp.dot(a_ref[...], b_ref[...], preferred_element_type=jnp.float32)
        o_ref[...] = jnp.exp(jnp.minimum(arg, log_var))

    # Diagonal tiles: same, plus noise_var on the local diagonal.
    @pl.when(i == j)
    def _():
        arg = jnp.dot(a_ref[...], b_ref[...], preferred_element_type=jnp.float32)
        k = jnp.exp(jnp.minimum(arg, log_var))
        tm, tn = o_ref.shape
        row = lax.broadcasted_iota(jnp.int32, (tm, tn), 0)
        col = lax.broadcasted_iota(jnp.int32, (tm, tn), 1)
        o_ref[...] = k + jnp.where(row == col, noise_var, 0.0).astype(k.dtype)

    # Strictly-upper tiles: never computed (symmetry).  Write zeros so the
    # output block is defined; the downstream Cholesky only reads the lower
    # triangle (symmetrize_input=False).
    @pl.when(i < j)
    def _():
        o_ref[...] = jnp.zeros_like(o_ref)


def _choose_tiling(N, max_tile=512):
    """Pick (N_pad, tile): largest tile whose row padding stays <= 25%."""
    n_pad, tile = max(_round_up(N, 128), 128), 128
    for t in (512, 256):
        if t > max_tile:
            continue
        cand = max(_round_up(N, t), t)
        if (cand - N) * 4 <= N:          # accept <= 25% padded rows
            n_pad, tile = cand, t
            break
    # v7x megacore: guarantee >= 2 grid steps on a "parallel" axis so the
    # second TensorCore gets work (neutral on single-TC v5e/v6e).
    if n_pad // tile < 2 and n_pad // 2 >= 128:
        tile = n_pad // 2                # n_pad in {256, 512} -> tile 128/256
    return n_pad, tile


def rbf_gram(X, *, variance, lengthscale, noise_var, max_tile=512):
    """Lower triangle (incl. diagonal) of K(X,X) + noise_var*I.

    Strictly-upper tiles of the returned matrix are zero; consume with
    lax.linalg.cholesky(..., symmetrize_input=False).
    """
    X = jnp.asarray(X, jnp.float32)
    N, F = X.shape
    N_pad, tile = _choose_tiling(N, max_tile)
    X_pad = X if N_pad == N else jnp.pad(X, ((0, N_pad - N), (0, 0)))

    gamma = -0.5 / float(lengthscale) ** 2
    log_var = math.log(float(variance))

    # Hoisted, one-time O(N*F) work: fold every rank-1 term into the
    # contraction so per-element kernel work is just min + exp + store.
    sq = gamma * jnp.sum(X_pad * X_pad, axis=-1)                 # (N_pad,)
    ones = jnp.ones((N_pad, 1), jnp.float32)
    A = jnp.concatenate([(-2.0 * gamma) * X_pad, sq[:, None], ones], axis=1)
    B = jnp.concatenate([X_pad.T, ones.T, (sq + log_var)[None, :]], axis=0)

    kern = functools.partial(_rbf_gram_kernel, log_var=log_var,
                             noise_var=float(noise_var))

    n_t = N_pad // tile
    lower_tiles = n_t * (n_t + 1) // 2
    cost = pl.CostEstimate(
        flops=2 * tile * tile * (F + 2) * lower_tiles,
        transcendentals=tile * tile * lower_tiles,
        bytes_accessed=4 * (N_pad * N_pad + 2 * N_pad * (F + 2)))

    K = pl.pallas_call(
        kern,
        out_shape=jax.ShapeDtypeStruct((N_pad, N_pad), jnp.float32),
        grid_spec=pltpu.PrefetchScalarGridSpec(
            num_scalar_prefetch=0,
            grid=(n_t, n_t),        # i outer, j inner: row block index (i, 0)
            in_specs=[              # repeats across j -> Pallas skips re-DMA
                pl.BlockSpec((tile, F + 2), lambda i, j: (i, 0)),
                pl.BlockSpec((F + 2, tile), lambda i, j: (0, j)),
            ],
            out_specs=pl.BlockSpec((tile, tile), lambda i, j: (i, j))),
        compiler_params=pltpu.CompilerParams(
            # Both axes independent (each output tile written exactly once);
            # parallel/parallel enables megacore sharding on v7x.  VMEM use
            # (~2*tile^2*4 B double-buffered output + tiny inputs) is a few
            # MiB, comfortably inside every generation's scoped limit.
            dimension_semantics=("parallel", "parallel")),
        cost_estimate=cost,
    )(A, B)

    if N_pad != N:
        K = K[:N, :N]
    return K


# ----------------------------------------------------------------------------
# GPR module (JAX/Pallas port of the PyTorch GPR.forward)
# ----------------------------------------------------------------------------
class GPRPallas:
    def __init__(self, X, Y, kernel_variance=1.0, kernel_lengthscale=1.0,
                 noise_var_lower=1e-5):
        self.X = X
        self.Y = Y
        self.variance = kernel_variance
        self.lengthscale = kernel_lengthscale
        self.noise_var_lower = noise_var_lower
        # PositiveVariable(0.01, lower=noise_var_lower):
        #   param = (v - lower) + log(-expm1(-(v - lower)))
        v = 0.01 - noise_var_lower
        self.noise_var_param = v + math.log(-math.expm1(-v))

    @property
    def noise_var(self):
        # transform: lower + softplus(param)
        return self.noise_var_lower + math.log1p(math.exp(self.noise_var_param))

    def forward(self):
        N, D = self.Y.shape
        ks = rbf_gram(self.X, variance=self.variance,
                      lengthscale=self.lengthscale,
                      noise_var=self.noise_var)
        # Only the lower triangle of ks is populated; symmetrize_input=False
        # skips XLA's hidden (K + K^T)/2 pass (an extra N^2 HBM round trip)
        # and only reads the lower triangle, matching the kernel's output.
        # TODO(synk): Cholesky factorization and triangular solve are
        # inherently sequential; no clean Pallas TPU equivalent, left to XLA.
        L = lax.linalg.cholesky(ks, symmetrize_input=False)
        err = self.Y  # mean_function(X) == 0
        alpha = jax.scipy.linalg.solve_triangular(L, err, lower=True)
        # Final O(N*D) reduction in plain jnp (a pallas_call launch costs more
        # than the work; equals -sum(p) of the PyTorch forward).
        nlml = (0.5 * jnp.sum(alpha * alpha)
                + D * jnp.sum(jnp.log(jnp.diagonal(L)))
                + 0.5 * N * D * jnp.log(2.0 * jnp.pi))
        return nlml


# ----------------------------------------------------------------------------
# Pure-JAX reference for verification
# ----------------------------------------------------------------------------
def ref_nlml(X, Y, variance, lengthscale, noise_var):
    d2 = jnp.sum((X[:, None, :] - X[None, :, :]) ** 2, axis=-1) / lengthscale ** 2
    K = variance * jnp.exp(-0.5 * d2) + noise_var * jnp.eye(X.shape[0])
    L = jnp.linalg.cholesky(K)
    alpha = jax.scipy.linalg.solve_triangular(L, Y, lower=True)
    N = Y.shape[0]
    p = (-0.5 * jnp.sum(alpha ** 2, axis=0)
         - 0.5 * N * jnp.log(2.0 * jnp.pi)
         - jnp.sum(jnp.log(jnp.diag(L))))
    return -jnp.sum(p)


if __name__ == "__main__":
    key = jax.random.PRNGKey(0)
    kx, ky = jax.random.split(key)
    # N=200 -> N_pad=256, tile=128, 2x2 grid: exercises the diagonal tile,
    # the strictly-lower compute tile, and the zeroed strictly-upper tile.
    N, F, D = 200, 8, 2
    X = jax.random.normal(kx, (N, F), dtype=jnp.float32)
    Y = jax.random.normal(ky, (N, D), dtype=jnp.float32)

    model = GPRPallas(X, Y, kernel_variance=1.0, kernel_lengthscale=1.0)
    out = model.forward()
    out = jax.block_until_ready(out)

    ref = ref_nlml(X, Y, 1.0, 1.0, model.noise_var)
    assert jnp.isfinite(out), "non-finite NLML"
    assert abs(float(out) - float(ref)) < 1e-2 * max(1.0, abs(float(ref))), \
        f"mismatch: pallas={float(out)} ref={float(ref)}"
    print("KERNEL_OK")
</pallas_src>

<mosaic_0001>
module attributes {stable_mosaic.version = 11 : i64} {
  func.func @_rbf_gram_kernel(%arg0: i32, %arg1: i32, %arg2: memref<128x10xf32, #tpu.memory_space<vmem>>, %arg3: memref<10x128xf32, #tpu.memory_space<vmem>>, %arg4: memref<128x128xf32, #tpu.memory_space<vmem>>) attributes {dimension_semantics = [#tpu.dimension_semantics<parallel>, #tpu.dimension_semantics<parallel>], iteration_bounds = array<i64: 2, 2>, scalar_prefetch = 0 : i64, scratch_operands = 0 : i64, tpu.core_type = #tpu.core_type<tc>, window_params = [{transform_indices = @transform_0, window_bounds = array<i64: 128, 10>}, {transform_indices = @transform_1, window_bounds = array<i64: 10, 128>}, {transform_indices = @transform_2, window_bounds = array<i64: 128, 128>}]} {
    %0 = arith.cmpi sgt, %arg0, %arg1 : i32
    %1 = arith.extui %0 : i1 to i32
    %c0_i32 = arith.constant 0 : i32
    %2 = arith.cmpi ne, %1, %c0_i32 : i32
    scf.if %2 {
      %c0 = arith.constant 0 : index
      %c0_2 = arith.constant 0 : index
      %9 = vector.load %arg2[%c0, %c0_2] : memref<128x10xf32, #tpu.memory_space<vmem>>, vector<128x10xf32>
      %c0_3 = arith.constant 0 : index
      %c0_4 = arith.constant 0 : index
      %10 = vector.load %arg3[%c0_3, %c0_4] : memref<10x128xf32, #tpu.memory_space<vmem>>, vector<10x128xf32>
      %cst = arith.constant dense<0.000000e+00> : vector<128x128xf32>
      %11 = tpu.matmul %9, %10, %cst {dimension_numbers = #tpu.dot_dimension_numbers<[1], [0], [0], [1], [0, 0, 1, 1], [], []>} : vector<128x10xf32>, vector<10x128xf32>, vector<128x128xf32> -> vector<128x128xf32>
      %cst_5 = arith.constant 0.000000e+00 : f32
      %12 = vector.broadcast %cst_5 : f32 to vector<128x128xf32>
      %13 = arith.minimumf %11, %12 : vector<128x128xf32>
      %14 = math.exp %13 : vector<128x128xf32>
      %c0_6 = arith.constant 0 : index
      %c0_7 = arith.constant 0 : index
      %15 = vector.load %arg4[%c0_6, %c0_7] : memref<128x128xf32, #tpu.memory_space<vmem>>, vector<128x128xf32>
      tpu.vector_store %arg4[%c0_6, %c0_7], %14 {strides = array<i32>} : memref<128x128xf32, #tpu.memory_space<vmem>>, vector<128x128xf32>,
    } else {
    }
    %3 = arith.cmpi eq, %arg0, %arg1 : i32
    %4 = arith.extui %3 : i1 to i32
    %c0_i32_0 = arith.constant 0 : i32
    %5 = arith.cmpi ne, %4, %c0_i32_0 : i32
    scf.if %5 {
      %c0 = arith.constant 0 : index
      %c0_2 = arith.constant 0 : index
      %9 = vector.load %arg2[%c0, %c0_2] : memref<128x10xf32, #tpu.memory_space<vmem>>, vector<128x10xf32>
      %c0_3 = arith.constant 0 : index
      %c0_4 = arith.constant 0 : index
      %10 = vector.load %arg3[%c0_3, %c0_4] : memref<10x128xf32, #tpu.memory_space<vmem>>, vector<10x128xf32>
      %cst = arith.constant dense<0.000000e+00> : vector<128x128xf32>
      %11 = tpu.matmul %9, %10, %cst {dimension_numbers = #tpu.dot_dimension_numbers<[1], [0], [0], [1], [0, 0, 1, 1], [], []>} : vector<128x10xf32>, vector<10x128xf32>, vector<128x128xf32> -> vector<128x128xf32>
      %cst_5 = arith.constant 0.000000e+00 : f32
      %12 = vector.broadcast %cst_5 : f32 to vector<128x128xf32>
      %13 = arith.minimumf %11, %12 : vector<128x128xf32>
      %14 = math.exp %13 : vector<128x128xf32>
      %15 = tpu.iota {dimensions = array<i32: 0>} : vector<128x128xi32>
      %16 = tpu.iota {dimensions = array<i32: 1>} : vector<128x128xi32>
      %17 = arith.cmpi eq, %15, %16 : vector<128x128xi32>
      %cst_6 = arith.constant 0.00999999977 : f32
      %cst_7 = arith.constant 0.000000e+00 : f32
      %18 = vector.broadcast %cst_6 : f32 to vector<128x128xf32>
      %19 = vector.broadcast %cst_7 : f32 to vector<128x128xf32>
      %20 = arith.select %17, %18, %19 : vector<128x128xi1>, vector<128x128xf32>
      %21 = arith.addf %14, %20 : vector<128x128xf32>
      %c0_8 = arith.constant 0 : index
      %c0_9 = arith.constant 0 : index
      %22 = vector.load %arg4[%c0_8, %c0_9] : memref<128x128xf32, #tpu.memory_space<vmem>>, vector<128x128xf32>
      tpu.vector_store %arg4[%c0_8, %c0_9], %21 {strides = array<i32>} : memref<128x128xf32, #tpu.memory_space<vmem>>, vector<128x128xf32>,
    } else {
    }
    %6 = arith.cmpi slt, %arg0, %arg1 : i32
    %7 = arith.extui %6 : i1 to i32
    %c0_i32_1 = arith.constant 0 : i32
    %8 = arith.cmpi ne, %7, %c0_i32_1 : i32
    scf.if %8 {
      %cst = arith.constant 0.000000e+00 : f32
      %9 = vector.broadcast %cst : f32 to vector<128x128xf32>
      %c0 = arith.constant 0 : index
      %c0_2 = arith.constant 0 : index
      %10 = vector.load %arg4[%c0, %c0_2] : memref<128x128xf32, #tpu.memory_space<vmem>>, vector<128x128xf32>
      tpu.vector_store %arg4[%c0, %c0_2], %9 {strides = array<i32>} : memref<128x128xf32, #tpu.memory_space<vmem>>, vector<128x128xf32>,
    } else {
    }
    return
  }
  func.func @transform_0(%arg0: i32, %arg1: i32) -> (i32, i32) {
    %c0_i32 = arith.constant 0 : i32
    %c0_i32_0 = arith.constant 0 : i32
    return %arg0, %c0_i32 : i32, i32
  }
  func.func @transform_1(%arg0: i32, %arg1: i32) -> (i32, i32) {
    %c0_i32 = arith.constant 0 : i32
    %c0_i32_0 = arith.constant 0 : i32
    return %c0_i32, %arg1 : i32, i32
  }
  func.func @transform_2(%arg0: i32, %arg1: i32) -> (i32, i32) {
    %c0_i32 = arith.constant 0 : i32
    return %arg0, %arg1 : i32, i32
  }
}

</mosaic_0001>

<llo_original>
// kernel: tpu_custom_call.1
$region0: #{tpu_custom_call.1}
  #allocation0 [shape = 'u32[]', space=smem, size = 0x4, offset = 0x4, fixed_abs, tag = 'smem constant byte address 0x4 - core index']
  #allocation1 [shape = 'u32[72,128]{1,0:T(1,128)}', space=vmem, size = 0x9000, scoped, tag = 'internal scratch']
  %s0 = inlined_call_operand.vmem [shape: f32[256,10], index: 0, kind: input, shape index: {}]
  %s1 = inlined_call_operand.vmem [shape: f32[10,256], index: 1, kind: input, shape index: {}]
  %s2 = inlined_call_operand.hbm [shape: f32[256,256], index: 2, kind: output, shape index: {}]
  %s3 = sld [smem:[#allocation0]]
  $region91: #{tpu_custom_call.1} parent=0
    _
  %s5 = ssub.s32 1, %s3
  %s6 = scalar_select 0, %s5, %s3
  $region1: #{tpu_custom_call.1} parent=0
    #allocation2 [shape = 'u8[16384]{0}', space=vmem, size = 0x4000, scoped, tag = 'input window, operand 1']
    #allocation3 [shape = 'u8[131072]{0}', space=vmem, size = 0x20000, scoped, tag = 'output window, operand 0']
    #allocation4 [shape = 's32[2]{0}', space=sflag, size = 0x8, scoped, tag = 'scoped memory for tpu_custom_call.1']
    %7 = vsyncpa [#allocation4], 0
    %s8 = scalar_lea.sflag [#allocation4], 1
    %9 = vsyncpa %s8, 0
    loop: start=0, step=1, limit=6
    $region2: #{tpu_custom_call.1} parent=1 // loop_pre_header
      _
    $region3: #{tpu_custom_call.1} parent=1 // loop_header
      %s11 = sphi 0, %s15
      %p12 = scmp.ge.s32.totalorder %s11, 6
      %s18 = sphi 0, %s30
      %s19 = sphi 0, %s26
      %s20 = sphi 0, %s18
      %s21 = sphi 0, %s19
      %s22 = sphi 0, %s20
      %s23 = sphi 0, %s21
      %s33 = sphi 0, %s35
      %s36 = sphi 0, %s33
      %s37 = sphi 0, %s36
      %s53 = sphi 0, %s37
      %s59 = sphi 0, %s61
      %s62 = sphi 0, %s59
      %s63 = sphi 0, %s62
      %s79 = sphi 0, %s63
      %s87 = sphi 0, %s89
      %s90 = sphi 0, %s87
      %s91 = sphi 0, %s90
      %s107 = sphi 0, %s91
    $region4: #{tpu_custom_call.1} parent=1 // loop_header_branch
      %14 = sbr.rel (%p12) target = $region8
    $region5: #{tpu_custom_call.1} parent=1 // loop_body
      %s16 = ssub.s32 %s11, 1
      %s17 = ssub.s32 %s11, 2
      %s24 = sadd.s32 1, %s19
      %p25 = scmp.ge.s32.totalorder %s24, 2
      %s26 = scalar_select %p25, 0, %s24
      %s27 = sadd.s32 1, %s18
      %s28 = scalar_select %p25, %s27, %s18
      %p29 = scmp.ge.s32.totalorder %s28, 2
      %s30 = scalar_select %p29, 0, %s28
      %s31 = ssub.s32 %s18, %s30
      %p32 = scmp.eq.s32.totalorder %s31, 0
      %s34 = sadd.s32 %s33, 1
      %s35 = scalar_select %p32, %s33, %s34
      %p38 = pneg %p32
      %p39 = scmp.eq.s32.totalorder %s11, 3
      %p40 = por %p38, %p39
      %p41 = scmp.ne.s32.totalorder %s33, %s36
      %p42 = scmp.eq.s32.totalorder %s11, 0
      %p43 = por %p41, %p42
      %p44 = scmp.ne.s32.totalorder %s33, %s36
      %p45 = scmp.eq.s32.totalorder %s16, 3
      %p46 = por %p44, %p45
      %p47 = scmp.ne.s32.totalorder %s36, %s37
      %p48 = scmp.eq.s32.totalorder %s16, 0
      %p49 = por %p47, %p48
      %p50 = scmp.ne.s32.totalorder %s36, %s37
      %p51 = scmp.eq.s32.totalorder %s17, 3
      %p52 = por %p50, %p51
      %p54 = scmp.ne.s32.totalorder %s37, %s53
      %p55 = scmp.eq.s32.totalorder %s17, 0
      %p56 = por %p54, %p55
      %s57 = ssub.s32 %s19, %s26
      %p58 = scmp.eq.s32.totalorder %s57, 0
      %s60 = sadd.s32 %s59, 1
      %s61 = scalar_select %p58, %s59, %s60
      %p64 = pneg %p58
      %p65 = scmp.eq.s32.totalorder %s11, 3
      %p66 = por %p64, %p65
      %p67 = scmp.ne.s32.totalorder %s59, %s62
      %p68 = scmp.eq.s32.totalorder %s11, 0
      %p69 = por %p67, %p68
      %p70 = scmp.ne.s32.totalorder %s59, %s62
      %p71 = scmp.eq.s32.totalorder %s16, 3
      %p72 = por %p70, %p71
      %p73 = scmp.ne.s32.totalorder %s62, %s63
      %p74 = scmp.eq.s32.totalorder %s16, 0
      %p75 = por %p73, %p74
      %p76 = scmp.ne.s32.totalorder %s62, %s63
      %p77 = scmp.eq.s32.totalorder %s17, 3
      %p78 = por %p76, %p77
      %p80 = scmp.ne.s32.totalorder %s63, %s79
      %p81 = scmp.eq.s32.totalorder %s17, 0
      %p82 = por %p80, %p81
      %s83 = ssub.s32 %s18, %s30
      %s84 = ssub.s32 %s19, %s26
      %s85 = sor.u32 %s83, %s84
      %p86 = scmp.eq.s32.totalorder %s85, 0
      %s88 = sadd.s32 %s87, 1
      %s89 = scalar_select %p86, %s87, %s88
      %p92 = pneg %p86
      %p93 = scmp.eq.s32.totalorder %s11, 3
      %p94 = por %p92, %p93
      %p95 = scmp.ne.s32.totalorder %s87, %s90
      %p96 = scmp.eq.s32.totalorder %s11, 0
      %p97 = por %p95, %p96
      %p98 = scmp.ne.s32.totalorder %s87, %s90
      %p99 = scmp.eq.s32.totalorder %s16, 3
      %p100 = por %p98, %p99
      %p101 = scmp.ne.s32.totalorder %s90, %s91
      %p102 = scmp.eq.s32.totalorder %s16, 0
      %p103 = por %p101, %p102
      %p104 = scmp.ne.s32.totalorder %s90, %s91
      %p105 = scmp.eq.s32.totalorder %s17, 3
      %p106 = por %p104, %p105
      %p108 = scmp.ne.s32.totalorder %s91, %s107
      %p109 = scmp.eq.s32.totalorder %s17, 0
      %p110 = por %p108, %p109
      %p111 = scmp.le.s32.totalorder 1, %s11
      %p112 = scmp.lt.s32.totalorder %s11, 5
      %p113 = pnand %p111, %p112
      %p114 = pneg %p113
      // Predicated region
      $region9: #{tpu_custom_call.1} parent=5 // pred_check
        _
      $region10: #{tpu_custom_call.1} parent=5 // pred_check_branch
        %116 = sbr.rel (%p113) target = $region12
      $region11: #{tpu_custom_call.1} parent=5 // pred_region
        %s117 = ssub.s32 %s11, 1
      $region12: #{tpu_custom_call.1} parent=5 // pred_fallthru
        _
      %p118 = scmp.lt.s32.totalorder %s11, 4
      // Predicated region
      $region13: #{tpu_custom_call.1} parent=5 // pred_check
        %p119 = pneg %p118
      $region14: #{tpu_custom_call.1} parent=5 // pred_check_branch
        %121 = sbr.rel (%p119) target = $region16
      $region15: #{tpu_custom_call.1} parent=5 // pred_region
        // Predicated region
        $region17: #{tpu_custom_call.1} parent=15 // pred_check
          %p122 = pneg %p43
        $region18: #{tpu_custom_call.1} parent=15 // pred_check_branch
          %124 = sbr.rel (%p122) target = $region20
        $region19: #{tpu_custom_call.1} parent=15 // pred_region
          %s125 = smul.u32 16, %s18
          %p126 = scmp.lt.s32.totalorder %s125, 31
          %s127 = scalar_select %p126, %s125, 31
          %s128 = smul.addr %s127, 8
          %s129 = scalar_lea.vmem %s0, %s128
          %s130 = smul.u32 16, %s18
        $region20: #{tpu_custom_call.1} parent=15 // pred_fallthru
          _
        // Predicated region
        $region21: #{tpu_custom_call.1} parent=15 // pred_check
          %p131 = pneg %p69
        $region22: #{tpu_custom_call.1} parent=15 // pred_check_branch
          %133 = sbr.rel (%p131) target = $region24
        $region23: #{tpu_custom_call.1} parent=15 // pred_region
          %s134 = sand.u32 %s59, 1
          %s135 = sand.u32 %s59, 1
          %s136 = smul.addr %s135, 16
          %s137 = scalar_lea.vmem [#allocation2], %s136
          %s138 = smul.addr %s19, 8
          %s139 = scalar_lea.vmem %s1, %s138
          // Predicated region
          $region25: #{tpu_custom_call.1} parent=23 // pred_check
            _
          $region26: #{tpu_custom_call.1} parent=23 // pred_check_branch
            %141 = sbr.rel (0) target = $region28
          $region27: #{tpu_custom_call.1} parent=23 // pred_region
            // Predicated region
            $region29: #{tpu_custom_call.1} parent=27 // pred_check
              _
            $region30: #{tpu_custom_call.1} parent=27 // pred_check_branch
              %143 = sbr.rel (0) target = $region32
            $region31: #{tpu_custom_call.1} parent=27 // pred_region
              // Predicated region
              $region44: #{tpu_custom_call.1} parent=31 // pred_check
                _
              $region45: #{tpu_custom_call.1} parent=31 // pred_check_branch
                %161 = sbr.rel (0) target = $region47
              $region46: #{tpu_custom_call.1} parent=31 // pred_region
                loop: start=0, step=1, limit=1
                $region48: #{tpu_custom_call.1} parent=46 // loop_pre_header
                  _
                $region49: #{tpu_custom_call.1} parent=46 // loop_header
                  %s163 = sphi 0, %s167
                  %p164 = scmp.ge.s32.totalorder %s163, 1
                  %s168 = sphi %s139, %s139
                  %s169 = sphi %s137, %s137
                $region50: #{tpu_custom_call.1} parent=46 // loop_header_branch
                  %166 = sbr.rel (%p164) target = $region54
                $region51: #{tpu_custom_call.1} parent=46 // loop_body
                  %v170 = vld [vmem:[%s168] sm:$0xff]
                  %171 = vst [vmem:[%s169] sm:$0xff] %v170
                  %v172 = vld [vmem:[%s168 + $0x10] sm:$0xff]
                  %173 = vst [vmem:[%s169 + $0x8] sm:$0xff] %v172
                $region52: #{tpu_custom_call.1} parent=46 // loop_footer
                  %s167 = sadd.s32 1, %s163
                $region53: #{tpu_custom_call.1} parent=46 // loop_footer_branch
                  %162 = sbr.rel target = $region49
                $region54: #{tpu_custom_call.1} parent=46 // loop_exit
                  _
              $region47: #{tpu_custom_call.1} parent=31 // pred_fallthru
                _
              // Predicated region
              $region55: #{tpu_custom_call.1} parent=31 // pred_check
                _
              $region56: #{tpu_custom_call.1} parent=31 // pred_check_branch
                %175 = sbr.rel target = $region58
              $region57: #{tpu_custom_call.1} parent=31 // pred_region
                _
              $region58: #{tpu_custom_call.1} parent=31 // pred_fallthru
                _
            $region32: #{tpu_custom_call.1} parent=27 // pred_fallthru
              _
            // Predicated region
            $region33: #{tpu_custom_call.1} parent=27 // pred_check
              _
            $region34: #{tpu_custom_call.1} parent=27 // pred_check_branch
              %145 = sbr.rel target = $region36
            $region35: #{tpu_custom_call.1} parent=27 // pred_region
              %s147 = ssub.s32 256, 1
              loop: start=0, step=1, limit=1
              $region37: #{tpu_custom_call.1} parent=35 // loop_pre_header
                _
              $region38: #{tpu_custom_call.1} parent=35 // loop_header
                %s149 = sphi 0, %s153
                %p150 = scmp.ge.s32.totalorder %s149, 1
                %s154 = sphi %s139, %s139
                %s155 = sphi %s137, %s137
              $region39: #{tpu_custom_call.1} parent=35 // loop_header_branch
                %152 = sbr.rel (%p150) target = $region43
              $region40: #{tpu_custom_call.1} parent=35 // loop_body
                %v156 = vld [vmem:[%s154] sm:%s147]
                %157 = vst [vmem:[%s155] sm:%s147] %v156
                %v158 = vld [vmem:[%s154 + $0x10] sm:%s147]
                %159 = vst [vmem:[%s155 + $0x8] sm:%s147] %v158
              $region41: #{tpu_custom_call.1} parent=35 // loop_footer
                %s153 = sadd.s32 1, %s149
              $region42: #{tpu_custom_call.1} parent=35 // loop_footer_branch
                %148 = sbr.rel target = $region38
              $region43: #{tpu_custom_call.1} parent=35 // loop_exit
                _
            $region36: #{tpu_custom_call.1} parent=27 // pred_fallthru
              _
          $region28: #{tpu_custom_call.1} parent=23 // pred_fallthru
            _
          %176 = vnop
        $region24: #{tpu_custom_call.1} parent=15 // pred_fallthru
          _
      $region16: #{tpu_custom_call.1} parent=5 // pred_fallthru
        _
      %p177 = scmp.le.s32.totalorder 1, %s11
      %p178 = scmp.lt.s32.totalorder %s11, 5
      %p179 = pnand %p177, %p178
      %p180 = pneg %p179
      // Predicated region
      $region59: #{tpu_custom_call.1} parent=5 // pred_check
        _
      $region60: #{tpu_custom_call.1} parent=5 // pred_check_branch
        %182 = sbr.rel (%p179) target = $region62
      $region61: #{tpu_custom_call.1} parent=5 // pred_region
        %s183 = ssub.s32 %s11, 1
        %s184 = sand.u32 %s62, 1
        %s185 = sand.u32 %s62, 1
        %s186 = smul.addr %s185, 16
        %s187 = scalar_lea.vmem [#allocation2], %s186
        // Predicated region
        $region63: #{tpu_custom_call.1} parent=61 // pred_check
          %p188 = pneg %p75
        $region64: #{tpu_custom_call.1} parent=61 // pred_check_branch
          %190 = sbr.rel (%p188) target = $region66
        $region65: #{tpu_custom_call.1} parent=61 // pred_region
          _
        $region66: #{tpu_custom_call.1} parent=61 // pred_fallthru
          _
        %s191 = smul.u32 16, %s20
        %p192 = scmp.lt.s32.totalorder %s191, 31
        %s193 = scalar_select %p192, %s191, 31
        %s194 = smul.addr %s193, 8
        %s195 = scalar_lea.vmem %s0, %s194
        %p196 = pneg %p49
        %p197 = pneg %p46
        %s198 = sand.u32 %s62, 1
        %s199 = sand.u32 %s62, 1
        %s200 = smul.addr %s199, 16
        %s201 = scalar_lea.vmem [#allocation2], %s200
        %p202 = pneg %p75
        %p203 = pneg %p72
        %p204 = pneg %p103
        %p205 = pneg %p100
        %s206 = sand.u32 %s90, 1
        %s207 = scalar_lea.sflag [#allocation4], %s206
        %s208 = sand.u32 %s90, 1
        %s209 = smul.addr %s208, 128
        %s210 = scalar_lea.vmem [#allocation3], %s209
        %s211 = smul.u32 16, %s20
        %p212 = scmp.lt.s32.totalorder %s211, 31
        %s213 = scalar_select %p212, %s211, 31
        %s214 = smul.addr %s213, 8
        %s215 = scalar_lea.vmem %s0, %s214
        %s216 = smul.u32 16, %s20
        %s217 = smul.u32 16, %s20
        %p218 = scmp.gt.s32.totalorder %s20, %s21
        // Predicated region
        $region67: #{tpu_custom_call.1} parent=61 // pred_check
          %p219 = pneg %p218
        $region68: #{tpu_custom_call.1} parent=61 // pred_check_branch
          %221 = sbr.rel (%p219) target = $region70
        $region69: #{tpu_custom_call.1} parent=61 // pred_region
          %v222 = vld [vmem:[%s215] sm:$0xff]
          %v223 = vld [vmem:[%s215 + $0x8] sm:$0xff]
          %v224 = vld [vmem:[%s215 + $0x10] sm:$0xff]
          %v225 = vld [vmem:[%s215 + $0x18] sm:$0xff]
          %v226 = vld [vmem:[%s215 + $0x20] sm:$0xff]
          %v227 = vld [vmem:[%s215 + $0x28] sm:$0xff]
          %v228 = vld [vmem:[%s215 + $0x30] sm:$0xff]
          %v229 = vld [vmem:[%s215 + $0x38] sm:$0xff]
          %v230 = vld [vmem:[%s215 + $0x40] sm:$0xff]
          %v231 = vld [vmem:[%s215 + $0x48] sm:$0xff]
          %v232 = vld [vmem:[%s215 + $0x50] sm:$0xff]
          %v233 = vld [vmem:[%s215 + $0x58] sm:$0xff]
          %v234 = vld [vmem:[%s215 + $0x60] sm:$0xff]
          %v235 = vld [vmem:[%s215 + $0x68] sm:$0xff]
          %v236 = vld [vmem:[%s215 + $0x70] sm:$0xff]
          %v237 = vld [vmem:[%s215 + $0x78] sm:$0xff]
          %v238 = vld [vmem:[%s187] sm:$0xff]
          %v239 = vld [vmem:[%s187 + $0x8] sm:$0x3]
          %vm240 = vcmask 80896
          %v242 = vsel %vm240, %v222, 0
          %v245 = vsel %vm240, %v223, 0
          %v248 = vsel %vm240, %v224, 0
          %v251 = vsel %vm240, %v225, 0
          %v254 = vsel %vm240, %v226, 0
          %v257 = vsel %vm240, %v227, 0
          %v260 = vsel %vm240, %v228, 0
          %v263 = vsel %vm240, %v229, 0
          %v266 = vsel %vm240, %v230, 0
          %v269 = vsel %vm240, %v231, 0
          %v272 = vsel %vm240, %v232, 0
          %v275 = vsel %vm240, %v233, 0
          %v278 = vsel %vm240, %v234, 0
          %v281 = vsel %vm240, %v235, 0
          %v284 = vsel %vm240, %v236, 0
          %v287 = vsel %vm240, %v237, 0
          %vm289 = vcmask 1041408
          %v291 = vsel %vm289, %v239, 0
          %293 = vmatpush.msra.mxu0 0.0
          %294 = vmatpush.msra.mxu0 0.0
          %295 = vmatpush.msra.mxu0 0.0
          %296 = vmatpush.msra.mxu0 0.0
          %297 = vmatpush.msra.mxu0 0.0
          %298 = vmatpush.msra.mxu0 0.0
          %299 = vmatpush.msra.mxu0 0.0
          %300 = vmatpush.msra.mxu0 0.0
          %301 = vmatpush.msra.mxu0 0.0
          %302 = vmatpush.msra.mxu0 0.0
          %303 = vmatpush.msra.mxu0 0.0
          %304 = vmatpush.msra.mxu0 0.0
          %305 = vmatpush.msra.mxu0 0.0
          %306 = vmatpush.msra.mxu0 0.0
          %307 = vmatpush.msra.mxu0 %v291
          %308 = vmatpush.msra.mxu0 %v238
          %309 = vmatmul.f32.gmra.mxu0 %v242
          %v310 = vpop.f32.mrf.mxu0
          %v311 = vadd.f32 0.0, %v310
          %312 = vmatmul.f32.gmra.mxu0 %v245
          %v313 = vpop.f32.mrf.mxu0
          %v314 = vadd.f32 0.0, %v313
          %315 = vmatmul.f32.gmra.mxu0 %v248
          %v316 = vpop.f32.mrf.mxu0
          %v317 = vadd.f32 0.0, %v316
          %318 = vmatmul.f32.gmra.mxu0 %v251
          %v319 = vpop.f32.mrf.mxu0
          %v320 = vadd.f32 0.0, %v319
          %321 = vmatmul.f32.gmra.mxu0 %v254
          %v322 = vpop.f32.mrf.mxu0
          %v323 = vadd.f32 0.0, %v322
          %324 = vmatmul.f32.gmra.mxu0 %v257
          %v325 = vpop.f32.mrf.mxu0
          %v326 = vadd.f32 0.0, %v325
          %327 = vmatmul.f32.gmra.mxu0 %v260
          %v328 = vpop.f32.mrf.mxu0
          %v329 = vadd.f32 0.0, %v328
          %330 = vmatmul.f32.gmra.mxu0 %v263
          %v331 = vpop.f32.mrf.mxu0
          %v332 = vadd.f32 0.0, %v331
          %333 = vmatmul.f32.gmra.mxu0 %v266
          %v334 = vpop.f32.mrf.mxu0
          %v335 = vadd.f32 0.0, %v334
          %336 = vmatmul.f32.gmra.mxu0 %v269
          %v337 = vpop.f32.mrf.mxu0
          %v338 = vadd.f32 0.0, %v337
          %339 = vmatmul.f32.gmra.mxu0 %v272
          %v340 = vpop.f32.mrf.mxu0
          %v341 = vadd.f32 0.0, %v340
          %342 = vmatmul.f32.gmra.mxu0 %v275
          %v343 = vpop.f32.mrf.mxu0
          %v344 = vadd.f32 0.0, %v343
          %345 = vmatmul.f32.gmra.mxu0 %v278
          %v346 = vpop.f32.mrf.mxu0
          %v347 = vadd.f32 0.0, %v346
          %348 = vmatmul.f32.gmra.mxu0 %v281
          %v349 = vpop.f32.mrf.mxu0
          %v350 = vadd.f32 0.0, %v349
          %351 = vmatmul.f32.gmra.mxu0 %v284
          %v352 = vpop.f32.mrf.mxu0
          %v353 = vadd.f32 0.0, %v352
          %354 = vmatmul.f32.gmra.mxu0 %v287
          %v355 = vpop.f32.mrf.mxu0
          %v356 = vadd.f32 0.0, %v355
          %357 = vdwg.mxu0
          %v358 = vmin.f32 %v311, 0.0
          %v359 = vmin.f32 %v314, 0.0
          %v360 = vmin.f32 %v317, 0.0
          %v361 = vmin.f32 %v320, 0.0
          %v362 = vmin.f32 %v323, 0.0
          %v363 = vmin.f32 %v326, 0.0
          %v364 = vmin.f32 %v329, 0.0
          %v365 = vmin.f32 %v332, 0.0
          %v366 = vmin.f32 %v335, 0.0
          %v367 = vmin.f32 %v338, 0.0
          %v368 = vmin.f32 %v341, 0.0
          %v369 = vmin.f32 %v344, 0.0
          %v370 = vmin.f32 %v347, 0.0
          %v371 = vmin.f32 %v350, 0.0
          %v372 = vmin.f32 %v353, 0.0
          %v373 = vmin.f32 %v356, 0.0
          %v374 = vmul.f32 %v358, 1.442695
          %v375 = vpow.pop %v374
          %v376 = vmul.f32 %v359, 1.442695
          %v377 = vpow.pop %v376
          %v378 = vmul.f32 %v360, 1.442695
          %v379 = vpow.pop %v378
          %v380 = vmul.f32 %v361, 1.442695
          %v381 = vpow.pop %v380
          %v382 = vmul.f32 %v362, 1.442695
          %v383 = vpow.pop %v382
          %v384 = vmul.f32 %v363, 1.442695
          %v385 = vpow.pop %v384
          %v386 = vmul.f32 %v364, 1.442695
          %v387 = vpow.pop %v386
          %v388 = vmul.f32 %v365, 1.442695
          %v389 = vpow.pop %v388
          %v390 = vmul.f32 %v366, 1.442695
          %v391 = vpow.pop %v390
          %v392 = vmul.f32 %v367, 1.442695
          %v393 = vpow.pop %v392
          %v394 = vmul.f32 %v368, 1.442695
          %v395 = vpow.pop %v394
          %v396 = vmul.f32 %v369, 1.442695
          %v397 = vpow.pop %v396
          %v398 = vmul.f32 %v370, 1.442695
          %v399 = vpow.pop %v398
          %v400 = vmul.f32 %v371, 1.442695
          %v401 = vpow.pop %v400
          %v402 = vmul.f32 %v372, 1.442695
          %v403 = vpow.pop %v402
          %v404 = vmul.f32 %v373, 1.442695
          %v405 = vpow.pop %v404
          %406 = vst [vmem:[%s210] sm:$0xff] %v375
          %407 = vst [vmem:[%s210 + $0x8] sm:$0xff] %v377
          %408 = vst [vmem:[%s210 + $0x10] sm:$0xff] %v379
          %409 = vst [vmem:[%s210 + $0x18] sm:$0xff] %v381
          %410 = vst [vmem:[%s210 + $0x20] sm:$0xff] %v383
          %411 = vst [vmem:[%s210 + $0x28] sm:$0xff] %v385
          %412 = vst [vmem:[%s210 + $0x30] sm:$0xff] %v387
          %413 = vst [vmem:[%s210 + $0x38] sm:$0xff] %v389
          %414 = vst [vmem:[%s210 + $0x40] sm:$0xff] %v391
          %415 = vst [vmem:[%s210 + $0x48] sm:$0xff] %v393
          %416 = vst [vmem:[%s210 + $0x50] sm:$0xff] %v395
          %417 = vst [vmem:[%s210 + $0x58] sm:$0xff] %v397
          %418 = vst [vmem:[%s210 + $0x60] sm:$0xff] %v399
          %419 = vst [vmem:[%s210 + $0x68] sm:$0xff] %v401
          %420 = vst [vmem:[%s210 + $0x70] sm:$0xff] %v403
          %421 = vst [vmem:[%s210 + $0x78] sm:$0xff] %v405
        $region70: #{tpu_custom_call.1} parent=61 // pred_fallthru
          _
        %p422 = scmp.eq.s32.totalorder %s20, %s21
        // Predicated region
        $region71: #{tpu_custom_call.1} parent=61 // pred_check
          %p423 = pneg %p422
        $region72: #{tpu_custom_call.1} parent=61 // pred_check_branch
          %425 = sbr.rel (%p423) target = $region74
        $region73: #{tpu_custom_call.1} parent=61 // pred_region
          %v426 = vld [vmem:[%s215] sm:$0xff]
          %v427 = vld [vmem:[%s215 + $0x8] sm:$0xff]
          %v428 = vld [vmem:[%s215 + $0x10] sm:$0xff]
          %v429 = vld [vmem:[%s215 + $0x18] sm:$0xff]
          %v430 = vld [vmem:[%s215 + $0x20] sm:$0xff]
          %v431 = vld [vmem:[%s215 + $0x28] sm:$0xff]
          %v432 = vld [vmem:[%s215 + $0x30] sm:$0xff]
          %v433 = vld [vmem:[%s215 + $0x38] sm:$0xff]
          %v434 = vld [vmem:[%s215 + $0x40] sm:$0xff]
          %v435 = vld [vmem:[%s215 + $0x48] sm:$0xff]
          %v436 = vld [vmem:[%s215 + $0x50] sm:$0xff]
          %v437 = vld [vmem:[%s215 + $0x58] sm:$0xff]
          %v438 = vld [vmem:[%s215 + $0x60] sm:$0xff]
          %v439 = vld [vmem:[%s215 + $0x68] sm:$0xff]
          %v440 = vld [vmem:[%s215 + $0x70] sm:$0xff]
          %v441 = vld [vmem:[%s215 + $0x78] sm:$0xff]
          %v442 = vld [vmem:[%s187] sm:$0xff]
          %v443 = vld [vmem:[%s187 + $0x8] sm:$0x3]
          %vm444 = vcmask 80896
          %v446 = vsel %vm444, %v426, 0
          %v449 = vsel %vm444, %v427, 0
          %v452 = vsel %vm444, %v428, 0
          %v455 = vsel %vm444, %v429, 0
          %v458 = vsel %vm444, %v430, 0
          %v461 = vsel %vm444, %v431, 0
          %v464 = vsel %vm444, %v432, 0
          %v467 = vsel %vm444, %v433, 0
          %v470 = vsel %vm444, %v434, 0
          %v473 = vsel %vm444, %v435, 0
          %v476 = vsel %vm444, %v436, 0
          %v479 = vsel %vm444, %v437, 0
          %v482 = vsel %vm444, %v438, 0
          %v485 = vsel %vm444, %v439, 0
          %v488 = vsel %vm444, %v440, 0
          %v491 = vsel %vm444, %v441, 0
          %vm493 = vcmask 1041408
          %v495 = vsel %vm493, %v443, 0
          %497 = vmatpush.msra.mxu0 0.0
          %498 = vmatpush.msra.mxu0 0.0
          %499 = vmatpush.msra.mxu0 0.0
          %500 = vmatpush.msra.mxu0 0.0
          %501 = vmatpush.msra.mxu0 0.0
          %502 = vmatpush.msra.mxu0 0.0
          %503 = vmatpush.msra.mxu0 0.0
          %504 = vmatpush.msra.mxu0 0.0
          %505 = vmatpush.msra.mxu0 0.0
          %506 = vmatpush.msra.mxu0 0.0
          %507 = vmatpush.msra.mxu0 0.0
          %508 = vmatpush.msra.mxu0 0.0
          %509 = vmatpush.msra.mxu0 0.0
          %510 = vmatpush.msra.mxu0 0.0
          %511 = vmatpush.msra.mxu0 %v495
          %512 = vmatpush.msra.mxu0 %v442
          %513 = vmatmul.f32.gmra.mxu0 %v446
          %v514 = vpop.f32.mrf.mxu0
          %v515 = vadd.f32 0.0, %v514
          %516 = vmatmul.f32.gmra.mxu0 %v449
          %v517 = vpop.f32.mrf.mxu0
          %v518 = vadd.f32 0.0, %v517
          %519 = vmatmul.f32.gmra.mxu0 %v452
          %v520 = vpop.f32.mrf.mxu0
          %v521 = vadd.f32 0.0, %v520
          %522 = vmatmul.f32.gmra.mxu0 %v455
          %v523 = vpop.f32.mrf.mxu0
          %v524 = vadd.f32 0.0, %v523
          %525 = vmatmul.f32.gmra.mxu0 %v458
          %v526 = vpop.f32.mrf.mxu0
          %v527 = vadd.f32 0.0, %v526
          %528 = vmatmul.f32.gmra.mxu0 %v461
          %v529 = vpop.f32.mrf.mxu0
          %v530 = vadd.f32 0.0, %v529
          %531 = vmatmul.f32.gmra.mxu0 %v464
          %v532 = vpop.f32.mrf.mxu0
          %v533 = vadd.f32 0.0, %v532
          %534 = vmatmul.f32.gmra.mxu0 %v467
          %v535 = vpop.f32.mrf.mxu0
          %v536 = vadd.f32 0.0, %v535
          %537 = vmatmul.f32.gmra.mxu0 %v470
          %v538 = vpop.f32.mrf.mxu0
          %v539 = vadd.f32 0.0, %v538
          %540 = vmatmul.f32.gmra.mxu0 %v473
          %v541 = vpop.f32.mrf.mxu0
          %v542 = vadd.f32 0.0, %v541
          %543 = vmatmul.f32.gmra.mxu0 %v476
          %v544 = vpop.f32.mrf.mxu0
          %v545 = vadd.f32 0.0, %v544
          %546 = vmatmul.f32.gmra.mxu0 %v479
          %v547 = vpop.f32.mrf.mxu0
          %v548 = vadd.f32 0.0, %v547
          %549 = vmatmul.f32.gmra.mxu0 %v482
          %v550 = vpop.f32.mrf.mxu0
          %v551 = vadd.f32 0.0, %v550
          %552 = vmatmul.f32.gmra.mxu0 %v485
          %v553 = vpop.f32.mrf.mxu0
          %v554 = vadd.f32 0.0, %v553
          %555 = vmatmul.f32.gmra.mxu0 %v488
          %v556 = vpop.f32.mrf.mxu0
          %v557 = vadd.f32 0.0, %v556
          %558 = vmatmul.f32.gmra.mxu0 %v491
          %v559 = vpop.f32.mrf.mxu0
          %v560 = vadd.f32 0.0, %v559
          %561 = vdwg.mxu0
          %v562 = vmin.f32 %v515, 0.0
          %v563 = vmin.f32 %v518, 0.0
          %v564 = vmin.f32 %v521, 0.0
          %v565 = vmin.f32 %v524, 0.0
          %v566 = vmin.f32 %v527, 0.0
          %v567 = vmin.f32 %v530, 0.0
          %v568 = vmin.f32 %v533, 0.0
          %v569 = vmin.f32 %v536, 0.0
          %v570 = vmin.f32 %v539, 0.0
          %v571 = vmin.f32 %v542, 0.0
          %v572 = vmin.f32 %v545, 0.0
          %v573 = vmin.f32 %v548, 0.0
          %v574 = vmin.f32 %v551, 0.0
          %v575 = vmin.f32 %v554, 0.0
          %v576 = vmin.f32 %v557, 0.0
          %v577 = vmin.f32 %v560, 0.0
          %v578 = vmul.f32 %v562, 1.442695
          %v579 = vpow.pop %v578
          %v580 = vmul.f32 %v563, 1.442695
          %v581 = vpow.pop %v580
          %v582 = vmul.f32 %v564, 1.442695
          %v583 = vpow.pop %v582
          %v584 = vmul.f32 %v565, 1.442695
          %v585 = vpow.pop %v584
          %v586 = vmul.f32 %v566, 1.442695
          %v587 = vpow.pop %v586
          %v588 = vmul.f32 %v567, 1.442695
          %v589 = vpow.pop %v588
          %v590 = vmul.f32 %v568, 1.442695
          %v591 = vpow.pop %v590
          %v592 = vmul.f32 %v569, 1.442695
          %v593 = vpow.pop %v592
          %v594 = vmul.f32 %v570, 1.442695
          %v595 = vpow.pop %v594
          %v596 = vmul.f32 %v571, 1.442695
          %v597 = vpow.pop %v596
          %v598 = vmul.f32 %v572, 1.442695
          %v599 = vpow.pop %v598
          %v600 = vmul.f32 %v573, 1.442695
          %v601 = vpow.pop %v600
          %v602 = vmul.f32 %v574, 1.442695
          %v603 = vpow.pop %v602
          %v604 = vmul.f32 %v575, 1.442695
          %v605 = vpow.pop %v604
          %v606 = vmul.f32 %v576, 1.442695
          %v607 = vpow.pop %v606
          %v608 = vmul.f32 %v577, 1.442695
          %v609 = vpow.pop %v608
          %v610 = vlaneseq
          %v611 = vshrl.u32 %v610, 7
          %v612 = vadd.s32 %v611, 8
          %v613 = vadd.s32 %v611, 16
          %v614 = vadd.s32 %v611, 24
          %v615 = vadd.s32 %v611, 32
          %v616 = vadd.s32 %v611, 40
          %v617 = vadd.s32 %v611, 48
          %v618 = vadd.s32 %v611, 56
          %v619 = vadd.s32 %v611, 64
          %v620 = vadd.s32 %v611, 72
          %v621 = vadd.s32 %v611, 80
          %v622 = vadd.s32 %v611, 88
          %v623 = vadd.s32 %v611, 96
          %v624 = vadd.s32 %v611, 104
          %v625 = vadd.s32 %v611, 112
          %v626 = vadd.s32 %v611, 120
          %v627 = vlaneseq
          %v628 = vand.u32 %v627, 127
          %vm629 = vcmp.eq.s32.totalorder %v611, %v628
          %vm630 = vcmp.eq.s32.totalorder %v612, %v628
          %vm631 = vcmp.eq.s32.totalorder %v613, %v628
          %vm632 = vcmp.eq.s32.totalorder %v614, %v628
          %vm633 = vcmp.eq.s32.totalorder %v615, %v628
          %vm634 = vcmp.eq.s32.totalorder %v616, %v628
          %vm635 = vcmp.eq.s32.totalorder %v617, %v628
          %vm636 = vcmp.eq.s32.totalorder %v618, %v628
          %vm637 = vcmp.eq.s32.totalorder %v619, %v628
          %vm638 = vcmp.eq.s32.totalorder %v620, %v628
          %vm639 = vcmp.eq.s32.totalorder %v621, %v628
          %vm640 = vcmp.eq.s32.totalorder %v622, %v628
          %vm641 = vcmp.eq.s32.totalorder %v623, %v628
          %vm642 = vcmp.eq.s32.totalorder %v624, %v628
          %vm643 = vcmp.eq.s32.totalorder %v625, %v628
          %vm644 = vcmp.eq.s32.totalorder %v626, %v628
          %v645 = vsel %vm629, 0.01, 0.0
          %v646 = vsel %vm630, 0.01, 0.0
          %v647 = vsel %vm631, 0.01, 0.0
          %v648 = vsel %vm632, 0.01, 0.0
          %v649 = vsel %vm633, 0.01, 0.0
          %v650 = vsel %vm634, 0.01, 0.0
          %v651 = vsel %vm635, 0.01, 0.0
          %v652 = vsel %vm636, 0.01, 0.0
          %v653 = vsel %vm637, 0.01, 0.0
          %v654 = vsel %vm638, 0.01, 0.0
          %v655 = vsel %vm639, 0.01, 0.0
          %v656 = vsel %vm640, 0.01, 0.0
          %v657 = vsel %vm641, 0.01, 0.0
          %v658 = vsel %vm642, 0.01, 0.0
          %v659 = vsel %vm643, 0.01, 0.0
          %v660 = vsel %vm644, 0.01, 0.0
          %v661 = vadd.f32 %v579, %v645
          %v662 = vadd.f32 %v581, %v646
          %v663 = vadd.f32 %v583, %v647
          %v664 = vadd.f32 %v585, %v648
          %v665 = vadd.f32 %v587, %v649
          %v666 = vadd.f32 %v589, %v650
          %v667 = vadd.f32 %v591, %v651
          %v668 = vadd.f32 %v593, %v652
          %v669 = vadd.f32 %v595, %v653
          %v670 = vadd.f32 %v597, %v654
          %v671 = vadd.f32 %v599, %v655
          %v672 = vadd.f32 %v601, %v656
          %v673 = vadd.f32 %v603, %v657
          %v674 = vadd.f32 %v605, %v658
          %v675 = vadd.f32 %v607, %v659
          %v676 = vadd.f32 %v609, %v660
          %677 = vst [vmem:[%s210] sm:$0xff] %v661
          %678 = vst [vmem:[%s210 + $0x8] sm:$0xff] %v662
          %679 = vst [vmem:[%s210 + $0x10] sm:$0xff] %v663
          %680 = vst [vmem:[%s210 + $0x18] sm:$0xff] %v664
          %681 = vst [vmem:[%s210 + $0x20] sm:$0xff] %v665
          %682 = vst [vmem:[%s210 + $0x28] sm:$0xff] %v666
          %683 = vst [vmem:[%s210 + $0x30] sm:$0xff] %v667
          %684 = vst [vmem:[%s210 + $0x38] sm:$0xff] %v668
          %685 = vst [vmem:[%s210 + $0x40] sm:$0xff] %v669
          %686 = vst [vmem:[%s210 + $0x48] sm:$0xff] %v670
          %687 = vst [vmem:[%s210 + $0x50] sm:$0xff] %v671
          %688 = vst [vmem:[%s210 + $0x58] sm:$0xff] %v672
          %689 = vst [vmem:[%s210 + $0x60] sm:$0xff] %v673
          %690 = vst [vmem:[%s210 + $0x68] sm:$0xff] %v674
          %691 = vst [vmem:[%s210 + $0x70] sm:$0xff] %v675
          %692 = vst [vmem:[%s210 + $0x78] sm:$0xff] %v676
        $region74: #{tpu_custom_call.1} parent=61 // pred_fallthru
          _
        %p693 = scmp.lt.s32.totalorder %s20, %s21
        // Predicated region
        $region75: #{tpu_custom_call.1} parent=61 // pred_check
          %p694 = pneg %p693
        $region76: #{tpu_custom_call.1} parent=61 // pred_check_branch
          %696 = sbr.rel (%p694) target = $region78
        $region77: #{tpu_custom_call.1} parent=61 // pred_region
          %697 = vst [vmem:[%s210] sm:$0xff] 0.0
          %698 = vst [vmem:[%s210 + $0x8] sm:$0xff] 0.0
          %699 = vst [vmem:[%s210 + $0x10] sm:$0xff] 0.0
          %700 = vst [vmem:[%s210 + $0x18] sm:$0xff] 0.0
          %701 = vst [vmem:[%s210 + $0x20] sm:$0xff] 0.0
          %702 = vst [vmem:[%s210 + $0x28] sm:$0xff] 0.0
          %703 = vst [vmem:[%s210 + $0x30] sm:$0xff] 0.0
          %704 = vst [vmem:[%s210 + $0x38] sm:$0xff] 0.0
          %705 = vst [vmem:[%s210 + $0x40] sm:$0xff] 0.0
          %706 = vst [vmem:[%s210 + $0x48] sm:$0xff] 0.0
          %707 = vst [vmem:[%s210 + $0x50] sm:$0xff] 0.0
          %708 = vst [vmem:[%s210 + $0x58] sm:$0xff] 0.0
          %709 = vst [vmem:[%s210 + $0x60] sm:$0xff] 0.0
          %710 = vst [vmem:[%s210 + $0x68] sm:$0xff] 0.0
          %711 = vst [vmem:[%s210 + $0x70] sm:$0xff] 0.0
          %712 = vst [vmem:[%s210 + $0x78] sm:$0xff] 0.0
        $region78: #{tpu_custom_call.1} parent=61 // pred_fallthru
          _
        %s713 = sand.u32 %s90, 1
        %s714 = scalar_lea.sflag [#allocation4], %s713
        %s715 = sand.u32 %s90, 1
        %s716 = smul.addr %s715, 128
        %s717 = scalar_lea.vmem [#allocation3], %s716
        // Predicated region
        $region79: #{tpu_custom_call.1} parent=61 // pred_check
          %p718 = pneg %p100
        $region80: #{tpu_custom_call.1} parent=61 // pred_check_branch
          %720 = sbr.rel (%p718) target = $region82
        $region81: #{tpu_custom_call.1} parent=61 // pred_region
          %s721 = smul.u32 16, %s20
          %723 = vsyncadd %s714, 0
          %s724 = smul.addr %s721, 2
          %s725 = sadd.s32 %s21, %s724
          %s726 = smul.addr %s725, 8
          %s727 = scalar_lea.hbm %s2, %s726
          %s728 = sshll.u32 %s717, 4
          %s729 = int_to_ptr.vmem [resolvable:$true] %s728
          %s730 = sshll.u32 %s727, 4
          %s731 = int_to_ptr.hbm [resolvable:$true] %s730
          %736 = dma.vmem_to_hbm [thread:$0]  %s729, 2048, %s731, %s714, 128, 256, 8
        $region82: #{tpu_custom_call.1} parent=61 // pred_fallthru
          _
      $region62: #{tpu_custom_call.1} parent=5 // pred_fallthru
        _
      %p737 = scmp.le.s32.totalorder 2, %s11
      // Predicated region
      $region83: #{tpu_custom_call.1} parent=5 // pred_check
        %p738 = pneg %p737
      $region84: #{tpu_custom_call.1} parent=5 // pred_check_branch
        %740 = sbr.rel (%p738) target = $region86
      $region85: #{tpu_custom_call.1} parent=5 // pred_region
        %s741 = ssub.s32 %s11, 2
        // Predicated region
        $region87: #{tpu_custom_call.1} parent=85 // pred_check
          %p742 = pneg %p106
        $region88: #{tpu_custom_call.1} parent=85 // pred_check_branch
          %744 = sbr.rel (%p742) target = $region90
        $region89: #{tpu_custom_call.1} parent=85 // pred_region
          %s745 = sand.u32 %s91, 1
          %s746 = scalar_lea.sflag [#allocation4], %s745
          %s747 = sand.u32 %s91, 1
          %s748 = smul.addr %s747, 128
          %s749 = scalar_lea.vmem [#allocation3], %s748
          %751 = dma.done %s746, 2048
        $region90: #{tpu_custom_call.1} parent=85 // pred_fallthru
          _
      $region86: #{tpu_custom_call.1} parent=5 // pred_fallthru
        _
    $region6: #{tpu_custom_call.1} parent=1 // loop_footer
      %s15 = sadd.s32 1, %s11
    $region7: #{tpu_custom_call.1} parent=1 // loop_footer_branch
      %10 = sbr.rel target = $region3
    $region8: #{tpu_custom_call.1} parent=1 // loop_exit
      _
    %752 = vsyncpa [#allocation4], 1
    %s753 = scalar_lea.sflag [#allocation4], 1
    %754 = vsyncpa %s753, 1

</llo_original>
